<compile_context>
chip_gen: v7x
topology: tpu7x:2x2x1
jax: 0.10.0
libtpu: 0.0.40
codegen_flags: <defaults>
</compile_context>

<pallas_src>
import math

import jax
import jax.numpy as jnp
from jax import lax
from jax.experimental import pallas as pl
from jax.experimental.pallas import tpu as pltpu

NEG_INF = -1e30  # finite "-inf" (avoids inf-inf NaNs in the online softmax)


def _pick_tile(dim, target, min_tile):
    """Largest tile <= target (halving steps, not below min_tile) dividing dim.
    Falls back to the full dim, which is always a legal block shape.
    TODO(synk): replace the full-dim fallback with pl.cdiv grids + in-kernel
    masking of the remainder for large non-divisible dims."""
    t = target
    while t >= min_tile:
        if dim >= t and dim % t == 0:
            return t
        t //= 2
    return dim


# ----------------------------------------------------------------------------
# Fused qkv projection: out[s] = x @ w3[s] + b3[s] for s in {q,k,v}.
# Grid = (3, M/tm, C/tn, K/tk); output (3, M, C) so q/k/v never exist as
# separate HBM copies.
# ----------------------------------------------------------------------------
def _qkv_projection(x2d, w3, b3, *, out_dtype=jnp.bfloat16,
                    tm_target=256, tn_target=256, tk_target=512):
    M, K = x2d.shape
    _, K2, C = w3.shape
    assert K == K2 and b3.shape == (3, 1, C)

    tm = _pick_tile(M, tm_target, 8)
    tn = _pick_tile(C, tn_target, 128)
    tk = _pick_tile(K, tk_target, 128)
    grid = (3, M // tm, C // tn, K // tk)

    def kernel(x_ref, w_ref, b_ref, o_ref, acc_ref):
        @pl.when(pl.program_id(3) == 0)
        def _init():
            acc_ref[...] = jnp.zeros_like(acc_ref)

        acc_ref[...] += jnp.dot(x_ref[...], w_ref[...],
                                preferred_element_type=jnp.float32)

        @pl.when(pl.program_id(3) == pl.num_programs(3) - 1)
        def _finalize():
            o_ref[...] = (acc_ref[...] + b_ref[...]).astype(o_ref.dtype)

    return pl.pallas_call(
        kernel,
        out_shape=jax.ShapeDtypeStruct((3, M, C), out_dtype),
        grid_spec=pltpu.PrefetchScalarGridSpec(
            num_scalar_prefetch=0,
            grid=grid,
            in_specs=[pl.BlockSpec((tm, tk), lambda s, i, j, k: (i, k)),
                      pl.BlockSpec((None, tk, tn), lambda s, i, j, k: (s, k, j)),
                      pl.BlockSpec((None, 1, tn), lambda s, i, j, k: (s, 0, j))],
            out_specs=pl.BlockSpec((None, tm, tn), lambda s, i, j, k: (s, i, j)),
            scratch_shapes=[pltpu.VMEM((tm, tn), jnp.float32)]),
        compiler_params=pltpu.CompilerParams(
            dimension_semantics=("parallel", "parallel", "parallel",
                                 "arbitrary")),
    )(x2d, w3, b3)


# ----------------------------------------------------------------------------
# Plain tiled linear (x @ W + b): grid = (M/tm, N/tn, K/tk), f32 accumulator.
# Callers pass bf16 x/W so the DMAs move bf16 tiles; bias stays f32.
# ----------------------------------------------------------------------------
def _linear_bias(x2d, w, b, *, out_dtype,
                 tm_target=256, tn_target=256, tk_target=512):
    M, K = x2d.shape
    K2, N = w.shape
    assert K == K2 and b.shape == (1, N)

    tm = _pick_tile(M, tm_target, 8)
    tn = _pick_tile(N, tn_target, 128)
    tk = _pick_tile(K, tk_target, 128)
    grid = (M // tm, N // tn, K // tk)

    def kernel(x_ref, w_ref, b_ref, o_ref, acc_ref):
        @pl.when(pl.program_id(2) == 0)
        def _init():
            acc_ref[...] = jnp.zeros_like(acc_ref)

        acc_ref[...] += jnp.dot(x_ref[...], w_ref[...],
                                preferred_element_type=jnp.float32)

        @pl.when(pl.program_id(2) == pl.num_programs(2) - 1)
        def _finalize():
            o_ref[...] = (acc_ref[...] + b_ref[...]).astype(o_ref.dtype)

    return pl.pallas_call(
        kernel,
        out_shape=jax.ShapeDtypeStruct((M, N), out_dtype),
        grid_spec=pltpu.PrefetchScalarGridSpec(
            num_scalar_prefetch=0,
            grid=grid,
            in_specs=[pl.BlockSpec((tm, tk), lambda i, j, k: (i, k)),
                      pl.BlockSpec((tk, tn), lambda i, j, k: (k, j)),
                      pl.BlockSpec((1, tn), lambda i, j, k: (0, j))],
            out_specs=pl.BlockSpec((tm, tn), lambda i, j, k: (i, j)),
            scratch_shapes=[pltpu.VMEM((tm, tn), jnp.float32)]),
        compiler_params=pltpu.CompilerParams(
            dimension_semantics=("parallel", "parallel", "arbitrary")),
    )(x2d, w, b)


# ----------------------------------------------------------------------------
# Flash-style causal attention, grid = (B, n_q_tiles).  K/V for the current
# batch element stay resident in VMEM; kv tiles are walked in-kernel, causal
# tiles only (the fori_loop bound is the q-tile index).
# ----------------------------------------------------------------------------
def _flash_causal_attention(qkv3, n_head, *, blk_target=128):
    """qkv3: (3, B, T, C) merged-head q/k/v (scale already folded into q)."""
    _, B, T, C = qkv3.shape
    assert C % n_head == 0
    hd = C // n_head
    # TODO(synk): make blk generation-conditional (256 q-tile / 128 kv-tile on
    # v6e/v7x, 128 on v5e) and add a streaming kv grid axis when T*C is too
    # large for resident K/V in VMEM.
    blk = _pick_tile(T, blk_target, 8)
    nt = T // blk

    def kernel(q_ref, k_ref, v_ref, o_ref, acc_ref, m_ref, l_ref):
        # q_ref: (blk, C); k_ref/v_ref: (T, C) resident; o_ref: (blk, C)
        # acc: (blk, C) f32; m/l: (n_head, blk, blk) f32 lane-replicated state.
        qi = pl.program_id(1)

        acc_ref[...] = jnp.zeros_like(acc_ref)
        m_ref[...] = jnp.full_like(m_ref, NEG_INF)
        l_ref[...] = jnp.zeros_like(l_ref)

        def process_tile(kv_idx, diag_mask):
            start = pl.multiple_of(kv_idx * blk, blk)
            pv_parts = []
            alpha_parts = []
            for h in range(n_head):
                q_h = q_ref[:, pl.ds(h * hd, hd)]                    # (blk, hd)
                k_h = k_ref[pl.ds(start, blk), pl.ds(h * hd, hd)]    # (blk, hd)
                v_h = v_ref[pl.ds(start, blk), pl.ds(h * hd, hd)]    # (blk, hd)
                # TODO(synk): if Mosaic emits a per-head XLU transpose for this
                # A.B^T dot_general, hoist one kv-tile transpose per step.
                s = lax.dot_general(q_h, k_h, (((1,), (1,)), ((), ())),
                                    preferred_element_type=jnp.float32)
                if diag_mask is not None:            # diagonal tile only
                    s = jnp.where(diag_mask, s, NEG_INF)

                m_prev = m_ref[h]                                    # (blk, blk)
                row_max = jnp.max(s, axis=-1, keepdims=True)         # (blk, 1)
                m_next = jnp.maximum(m_prev, row_max)                # (blk, blk)
                alpha = jnp.exp(m_prev[:, :1] - m_next[:, :1])       # (blk, 1)
                p = jnp.exp(s - m_next)                              # (blk, blk)
                l_ref[h] = alpha * l_ref[h] + jnp.sum(p, axis=-1, keepdims=True)
                m_ref[h] = m_next

                pv_parts.append(jnp.dot(p.astype(jnp.bfloat16), v_h,
                                        preferred_element_type=jnp.float32))
                alpha_parts.append(jnp.broadcast_to(alpha, (blk, hd)))

            # Single lane-dense (blk, C) read-modify-write per kv tile.
            pv_full = jnp.concatenate(pv_parts, axis=-1)
            alpha_full = jnp.concatenate(alpha_parts, axis=-1)
            acc_ref[...] = alpha_full * acc_ref[...] + pv_full

        # Strictly-below-diagonal kv tiles: no masking work at all.
        def body(j, carry):
            process_tile(j, None)
            return carry
        lax.fori_loop(0, qi, body, 0)

        # Diagonal kv tile: within-tile causal mask (square q/kv tiles).
        row = lax.broadcasted_iota(jnp.int32, (blk, blk), 0)
        col = lax.broadcasted_iota(jnp.int32, (blk, blk), 1)
        process_tile(qi, col <= row)

        # Finalize: one lane-dense (blk, C) store.
        inv_parts = []
        for h in range(n_head):
            inv = pl.reciprocal(l_ref[h][:, :1], approx=True)        # EUP slot
            inv_parts.append(jnp.broadcast_to(inv, (blk, hd)))
        inv_full = jnp.concatenate(inv_parts, axis=-1)               # (blk, C)
        o_ref[...] = (acc_ref[...] * inv_full).astype(o_ref.dtype)

    return pl.pallas_call(
        kernel,
        out_shape=jax.ShapeDtypeStruct((B, T, C), qkv3.dtype),
        grid_spec=pltpu.PrefetchScalarGridSpec(
            num_scalar_prefetch=0,
            grid=(B, nt),
            in_specs=[
                pl.BlockSpec((None, None, blk, C), lambda b, i: (0, b, i, 0)),
                pl.BlockSpec((None, None, T, C), lambda b, i: (1, b, 0, 0)),
                pl.BlockSpec((None, None, T, C), lambda b, i: (2, b, 0, 0))],
            out_specs=pl.BlockSpec((None, blk, C), lambda b, i: (b, i, 0)),
            scratch_shapes=[pltpu.VMEM((blk, C), jnp.float32),          # acc
                            pltpu.VMEM((n_head, blk, blk), jnp.float32),  # m
                            pltpu.VMEM((n_head, blk, blk), jnp.float32)]),  # l
        compiler_params=pltpu.CompilerParams(
            dimension_semantics=("parallel", "parallel")),
    )(qkv3, qkv3, qkv3)


# ----------------------------------------------------------------------------
# Full module forward: fused qkv projection -> flash attention -> output proj.
# ----------------------------------------------------------------------------
def causal_self_attention(x, w_attn, b_attn, w_proj, b_proj, n_head):
    B, T, C = x.shape
    assert C % n_head == 0
    hd = C // n_head
    scale = 1.0 / math.sqrt(hd)

    # (C, 3C) -> (3, C, C) per-output weight stack; fold the attention scale
    # into the q projection so the kernel never rescales q.
    w3 = jnp.transpose(w_attn.reshape(C, 3, C), (1, 0, 2))
    b3 = b_attn.reshape(3, 1, C)
    w3 = w3.at[0].multiply(scale)
    b3 = b3.at[0].multiply(scale)

    x_bf = x.reshape(B * T, C).astype(jnp.bfloat16)

    # qkv projection straight into the (3, B*T, C) layout consumed by the
    # attention kernel (q/k/v never materialized as separate HBM copies).
    qkv3 = _qkv_projection(x_bf, w3.astype(jnp.bfloat16),
                           b3.astype(jnp.float32))
    qkv3 = qkv3.reshape(3, B, T, C)

    y = _flash_causal_attention(qkv3, n_head)                # (B, T, C) bf16

    out2d = _linear_bias(y.reshape(B * T, C),
                         w_proj.astype(jnp.bfloat16),
                         b_proj.astype(jnp.float32),
                         out_dtype=x.dtype)
    return out2d.reshape(B, T, C)


def reference(x, w_attn, b_attn, w_proj, b_proj, n_head):
    """Plain-JAX (f32) replica of the PyTorch forward for validation."""
    B, T, C = x.shape
    hd = C // n_head
    qkv = x @ w_attn + b_attn[0]
    q, k, v = jnp.split(qkv, 3, axis=-1)
    q = q.reshape(B, T, n_head, hd).transpose(0, 2, 1, 3)
    k = k.reshape(B, T, n_head, hd).transpose(0, 2, 1, 3)
    v = v.reshape(B, T, n_head, hd).transpose(0, 2, 1, 3)
    attn = (q @ jnp.swapaxes(k, -2, -1)) * (1.0 / math.sqrt(hd))
    mask = jnp.tril(jnp.ones((T, T), dtype=bool))
    attn = jnp.where(mask[None, None], attn, -jnp.inf)
    attn = jax.nn.softmax(attn, axis=-1)
    y = (attn @ v).transpose(0, 2, 1, 3).reshape(B, T, C)
    return y @ w_proj + b_proj[0]


if __name__ == "__main__":
    # small shapes consistent with the module: n_embd=32, n_head=4, T=8
    B, T, C, n_head = 2, 8, 32, 4

    key = jax.random.PRNGKey(0)
    kx, k1, k2, k3, k4 = jax.random.split(key, 5)

    x = jax.random.normal(kx, (B, T, C), dtype=jnp.float32)
    # deterministic synthetic parameters (in_features, out_features layout)
    w_attn = jax.random.normal(k1, (C, 3 * C), dtype=jnp.float32) * 0.02
    b_attn = jax.random.normal(k2, (1, 3 * C), dtype=jnp.float32) * 0.02
    w_proj = jax.random.normal(k3, (C, C), dtype=jnp.float32) * 0.02
    b_proj = jax.random.normal(k4, (1, C), dtype=jnp.float32) * 0.02

    out = causal_self_attention(x, w_attn, b_attn, w_proj, b_proj, n_head)
    out = jax.block_until_ready(out)

    ref = reference(x, w_attn, b_attn, w_proj, b_proj, n_head)
    assert out.shape == (B, T, C)
    # bf16 MXU operands / bf16 intermediates with f32 accumulation: loose tol.
    assert jnp.allclose(out, ref, atol=2e-2, rtol=2e-2), "mismatch vs reference"

    print("KERNEL_OK")
</pallas_src>

<mosaic_0001>
module attributes {stable_mosaic.version = 11 : i64} {
  func.func @kernel(%arg0: i32, %arg1: i32, %arg2: i32, %arg3: i32, %arg4: memref<16x32xbf16, #tpu.memory_space<vmem>>, %arg5: memref<1x32x32xbf16, #tpu.memory_space<vmem>>, %arg6: memref<1x1x32xf32, #tpu.memory_space<vmem>>, %arg7: memref<1x16x32xbf16, #tpu.memory_space<vmem>>, %arg8: memref<16x32xf32, #tpu.memory_space<vmem>>) attributes {dimension_semantics = [#tpu.dimension_semantics<parallel>, #tpu.dimension_semantics<parallel>, #tpu.dimension_semantics<parallel>, #tpu.dimension_semantics<arbitrary>], iteration_bounds = array<i64: 3, 1, 1, 1>, scalar_prefetch = 0 : i64, scratch_operands = 1 : i64, tpu.core_type = #tpu.core_type<tc>, window_params = [{transform_indices = @transform_0, window_bounds = array<i64: 16, 32>}, {transform_indices = @transform_1, window_bounds = array<i64: 1, 32, 32>}, {transform_indices = @transform_2, window_bounds = array<i64: 1, 1, 32>}, {transform_indices = @transform_3, window_bounds = array<i64: 1, 16, 32>}]} {
    %c0_i32 = arith.constant 0 : i32
    %0 = arith.cmpi eq, %arg3, %c0_i32 : i32
    %1 = arith.extui %0 : i1 to i32
    %c0_i32_0 = arith.constant 0 : i32
    %2 = arith.cmpi ne, %1, %c0_i32_0 : i32
    scf.if %2 {
      %cst_11 = arith.constant 0.000000e+00 : f32
      %13 = vector.broadcast %cst_11 : f32 to vector<16x32xf32>
      %c0_12 = arith.constant 0 : index
      %c0_13 = arith.constant 0 : index
      %14 = vector.load %arg8[%c0_12, %c0_13] : memref<16x32xf32, #tpu.memory_space<vmem>>, vector<16x32xf32>
      tpu.vector_store %arg8[%c0_12, %c0_13], %13 {strides = array<i32>} : memref<16x32xf32, #tpu.memory_space<vmem>>, vector<16x32xf32>,
    } else {
    }
    %c0 = arith.constant 0 : index
    %c0_1 = arith.constant 0 : index
    %3 = vector.load %arg8[%c0, %c0_1] : memref<16x32xf32, #tpu.memory_space<vmem>>, vector<16x32xf32>
    %c0_2 = arith.constant 0 : index
    %c0_3 = arith.constant 0 : index
    %4 = vector.load %arg4[%c0_2, %c0_3] : memref<16x32xbf16, #tpu.memory_space<vmem>>, vector<16x32xbf16>
    %c0_4 = arith.constant 0 : index
    %c0_5 = arith.constant 0 : index
    %c0_6 = arith.constant 0 : index
    %5 = vector.load %arg5[%c0_4, %c0_5, %c0_6] : memref<1x32x32xbf16, #tpu.memory_space<vmem>>, vector<1x32x32xbf16>
    %6 = vector.shape_cast %5 : vector<1x32x32xbf16> to vector<32x32xbf16>
    %cst = arith.constant dense<0.000000e+00> : vector<16x32xf32>
    %7 = tpu.matmul %4, %6, %cst {dimension_numbers = #tpu.dot_dimension_numbers<[1], [0], [0], [1], [0, 0, 1, 1], [], []>} : vector<16x32xbf16>, vector<32x32xbf16>, vector<16x32xf32> -> vector<16x32xf32>
    %8 = arith.addf %3, %7 : vector<16x32xf32>
    %c0_7 = arith.constant 0 : index
    %c0_8 = arith.constant 0 : index
    %9 = vector.load %arg8[%c0_7, %c0_8] : memref<16x32xf32, #tpu.memory_space<vmem>>, vector<16x32xf32>
    tpu.vector_store %arg8[%c0_7, %c0_8], %8 {strides = array<i32>} : memref<16x32xf32, #tpu.memory_space<vmem>>, vector<16x32xf32>,
    %c0_i32_9 = arith.constant 0 : i32
    %10 = arith.cmpi eq, %arg3, %c0_i32_9 : i32
    %11 = arith.extui %10 : i1 to i32
    %c0_i32_10 = arith.constant 0 : i32
    %12 = arith.cmpi ne, %11, %c0_i32_10 : i32
    scf.if %12 {
      %c0_11 = arith.constant 0 : index
      %c0_12 = arith.constant 0 : index
      %13 = vector.load %arg8[%c0_11, %c0_12] : memref<16x32xf32, #tpu.memory_space<vmem>>, vector<16x32xf32>
      %c0_13 = arith.constant 0 : index
      %c0_14 = arith.constant 0 : index
      %c0_15 = arith.constant 0 : index
      %14 = vector.load %arg6[%c0_13, %c0_14, %c0_15] : memref<1x1x32xf32, #tpu.memory_space<vmem>>, vector<1x1x32xf32>
      %15 = vector.shape_cast %14 : vector<1x1x32xf32> to vector<1x32xf32>
      %16 = vector.broadcast %15 : vector<1x32xf32> to vector<16x32xf32>
      %17 = arith.addf %13, %16 : vector<16x32xf32>
      %18 = arith.truncf %17 : vector<16x32xf32> to vector<16x32xbf16>
      %c0_16 = arith.constant 0 : index
      %c0_17 = arith.constant 0 : index
      %c0_18 = arith.constant 0 : index
      %19 = vector.load %arg7[%c0_16, %c0_17, %c0_18] : memref<1x16x32xbf16, #tpu.memory_space<vmem>>, vector<1x16x32xbf16>
      %20 = vector.shape_cast %19 : vector<1x16x32xbf16> to vector<16x32xbf16>
      %21 = vector.shape_cast %18 : vector<16x32xbf16> to vector<1x16x32xbf16>
      tpu.vector_store %arg7[%c0_16, %c0_17, %c0_18], %21 {strides = array<i32>} : memref<1x16x32xbf16, #tpu.memory_space<vmem>>, vector<1x16x32xbf16>,
    } else {
    }
    return
  }
  func.func @transform_0(%arg0: i32, %arg1: i32, %arg2: i32, %arg3: i32) -> (i32, i32) {
    %c0_i32 = arith.constant 0 : i32
    return %arg1, %arg3 : i32, i32
  }
  func.func @transform_1(%arg0: i32, %arg1: i32, %arg2: i32, %arg3: i32) -> (i32, i32, i32) {
    %c0_i32 = arith.constant 0 : i32
    return %arg0, %arg3, %arg2 : i32, i32, i32
  }
  func.func @transform_2(%arg0: i32, %arg1: i32, %arg2: i32, %arg3: i32) -> (i32, i32, i32) {
    %c0_i32 = arith.constant 0 : i32
    %c0_i32_0 = arith.constant 0 : i32
    return %arg0, %c0_i32, %arg2 : i32, i32, i32
  }
  func.func @transform_3(%arg0: i32, %arg1: i32, %arg2: i32, %arg3: i32) -> (i32, i32, i32) {
    %c0_i32 = arith.constant 0 : i32
    return %arg0, %arg1, %arg2 : i32, i32, i32
  }
}

</mosaic_0001>

<llo_original>
// kernel: tpu_custom_call.1
$region0: #{tpu_custom_call.1}
  #allocation0 [shape = 'u32[]', space=smem, size = 0x4, offset = 0x4, fixed_abs, tag = 'smem constant byte address 0x4 - core index']
  #allocation1 [shape = 'u32[144,128]{1,0:T(1,128)}', space=vmem, size = 0x12000, scoped, tag = 'internal scratch']
  #allocation2 [shape = 'f32[16,32]{1,0:T(8,128)}', space=vmem, size = 0x2000, scoped, tag = 'scratch operand']
  %s0 = inlined_call_operand.hbm [shape: bf16[16,32], index: 0, kind: input, shape index: {}]
  %s1 = inlined_call_operand.hbm [shape: bf16[3,32,32], index: 1, kind: input, shape index: {}]
  %s2 = inlined_call_operand.vmem [shape: f32[3,1,32], index: 2, kind: input, shape index: {}]
  %s3 = inlined_call_operand.hbm [shape: bf16[3,16,32], index: 3, kind: output, shape index: {}]
  %s4 = sld [smem:[#allocation0]]
  $region61: #{tpu_custom_call.1} parent=0
    _
  %s6 = ssub.s32 1, %s4
  %s7 = scalar_select 0, %s6, %s4
  $region1: #{tpu_custom_call.1} parent=0
    #allocation3 [shape = 'u8[4096]{0}', space=vmem, size = 0x1000, scoped, tag = 'input window, operand 0, single buffered']
    #allocation4 [shape = 's32[2]{0}', space=sflag, size = 0x8, scoped, tag = 'scoped memory for tpu_custom_call.1']
    #allocation5 [shape = 's32[2]{0}', space=sflag, size = 0x8, scoped, tag = 'scoped memory for tpu_custom_call.1']
    #allocation6 [shape = 'u8[16384]{0}', space=vmem, size = 0x4000, scoped, tag = 'input window, operand 1']
    #allocation7 [shape = 's32[2]{0}', space=sflag, size = 0x8, scoped, tag = 'scoped memory for tpu_custom_call.1']
    #allocation8 [shape = 'u8[8192]{0}', space=vmem, size = 0x2000, scoped, tag = 'output window, operand 0']
    %8 = vsyncpa [#allocation4], 0
    %9 = vsyncpa [#allocation7], 0
    %s10 = scalar_lea.sflag [#allocation7], 1
    %11 = vsyncpa %s10, 0
    %12 = vsyncpa [#allocation5], 0
    %s13 = scalar_lea.sflag [#allocation5], 1
    %14 = vsyncpa %s13, 0
    loop: start=0, step=1, limit=5
    $region2: #{tpu_custom_call.1} parent=1 // loop_pre_header
      _
    $region3: #{tpu_custom_call.1} parent=1 // loop_header
      %s16 = sphi 0, %s20
      %p17 = scmp.ge.s32.totalorder %s16, 5
      %s23 = sphi 0, %s49
      %s24 = sphi 0, %s45
      %s25 = sphi 0, %s41
      %s26 = sphi 0, %s37
      %s27 = sphi 0, %s23
      %s28 = sphi 0, %s24
      %s29 = sphi 0, %s25
      %s30 = sphi 0, %s26
      %s31 = sphi 0, %s27
      %s32 = sphi 0, %s28
      %s33 = sphi 0, %s29
      %s34 = sphi 0, %s30
      %s54 = sphi 0, %s56
      %s57 = sphi 0, %s54
      %s58 = sphi 0, %s57
      %s74 = sphi 0, %s58
      %s84 = sphi 0, %s86
      %s87 = sphi 0, %s84
      %s88 = sphi 0, %s87
      %s104 = sphi 0, %s88
      %s112 = sphi 0, %s114
      %s115 = sphi 0, %s112
      %s116 = sphi 0, %s115
      %s132 = sphi 0, %s116
      %s142 = sphi 0, %s144
      %s145 = sphi 0, %s142
      %s146 = sphi 0, %s145
      %s162 = sphi 0, %s146
    $region4: #{tpu_custom_call.1} parent=1 // loop_header_branch
      %19 = sbr.rel (%p17) target = $region8
    $region5: #{tpu_custom_call.1} parent=1 // loop_body
      %s21 = ssub.s32 %s16, 1
      %s22 = ssub.s32 %s16, 2
      %s35 = sadd.s32 1, %s26
      %p36 = scmp.ge.s32.totalorder %s35, 1
      %s37 = scalar_select %p36, 0, %s35
      %s38 = sadd.s32 1, %s25
      %s39 = scalar_select %p36, %s38, %s25
      %p40 = scmp.ge.s32.totalorder %s39, 1
      %s41 = scalar_select %p40, 0, %s39
      %s42 = sadd.s32 1, %s24
      %s43 = scalar_select %p40, %s42, %s24
      %p44 = scmp.ge.s32.totalorder %s43, 1
      %s45 = scalar_select %p44, 0, %s43
      %s46 = sadd.s32 1, %s23
      %s47 = scalar_select %p44, %s46, %s23
      %p48 = scmp.ge.s32.totalorder %s47, 3
      %s49 = scalar_select %p48, 0, %s47
      %s50 = ssub.s32 %s24, %s45
      %s51 = ssub.s32 %s26, %s37
      %s52 = sor.u32 %s50, %s51
      %p53 = scmp.eq.s32.totalorder %s52, 0
      %s55 = sadd.s32 %s54, 1
      %s56 = scalar_select %p53, %s54, %s55
      %p59 = pneg %p53
      %p60 = scmp.eq.s32.totalorder %s16, 2
      %p61 = por %p59, %p60
      %p62 = scmp.ne.s32.totalorder %s54, %s57
      %p63 = scmp.eq.s32.totalorder %s16, 0
      %p64 = por %p62, %p63
      %p65 = scmp.ne.s32.totalorder %s54, %s57
      %p66 = scmp.eq.s32.totalorder %s21, 2
      %p67 = por %p65, %p66
      %p68 = scmp.ne.s32.totalorder %s57, %s58
      %p69 = scmp.eq.s32.totalorder %s21, 0
      %p70 = por %p68, %p69
      %p71 = scmp.ne.s32.totalorder %s57, %s58
      %p72 = scmp.eq.s32.totalorder %s22, 2
      %p73 = por %p71, %p72
      %p75 = scmp.ne.s32.totalorder %s58, %s74
      %p76 = scmp.eq.s32.totalorder %s22, 0
      %p77 = por %p75, %p76
      %s78 = ssub.s32 %s23, %s49
      %s79 = ssub.s32 %s26, %s37
      %s80 = sor.u32 %s78, %s79
      %s81 = ssub.s32 %s25, %s41
      %s82 = sor.u32 %s80, %s81
      %p83 = scmp.eq.s32.totalorder %s82, 0
      %s85 = sadd.s32 %s84, 1
      %s86 = scalar_select %p83, %s84, %s85
      %p89 = pneg %p83
      %p90 = scmp.eq.s32.totalorder %s16, 2
      %p91 = por %p89, %p90
      %p92 = scmp.ne.s32.totalorder %s84, %s87
      %p93 = scmp.eq.s32.totalorder %s16, 0
      %p94 = por %p92, %p93
      %p95 = scmp.ne.s32.totalorder %s84, %s87
      %p96 = scmp.eq.s32.totalorder %s21, 2
      %p97 = por %p95, %p96
      %p98 = scmp.ne.s32.totalorder %s87, %s88
      %p99 = scmp.eq.s32.totalorder %s21, 0
      %p100 = por %p98, %p99
      %p101 = scmp.ne.s32.totalorder %s87, %s88
      %p102 = scmp.eq.s32.totalorder %s22, 2
      %p103 = por %p101, %p102
      %p105 = scmp.ne.s32.totalorder %s88, %s104
      %p106 = scmp.eq.s32.totalorder %s22, 0
      %p107 = por %p105, %p106
      %s108 = ssub.s32 %s23, %s49
      %s109 = ssub.s32 %s25, %s41
      %s110 = sor.u32 %s108, %s109
      %p111 = scmp.eq.s32.totalorder %s110, 0
      %s113 = sadd.s32 %s112, 1
      %s114 = scalar_select %p111, %s112, %s113
      %p117 = pneg %p111
      %p118 = scmp.eq.s32.totalorder %s16, 2
      %p119 = por %p117, %p118
      %p120 = scmp.ne.s32.totalorder %s112, %s115
      %p121 = scmp.eq.s32.totalorder %s16, 0
      %p122 = por %p120, %p121
      %p123 = scmp.ne.s32.totalorder %s112, %s115
      %p124 = scmp.eq.s32.totalorder %s21, 2
      %p125 = por %p123, %p124
      %p126 = scmp.ne.s32.totalorder %s115, %s116
      %p127 = scmp.eq.s32.totalorder %s21, 0
      %p128 = por %p126, %p127
      %p129 = scmp.ne.s32.totalorder %s115, %s116
      %p130 = scmp.eq.s32.totalorder %s22, 2
      %p131 = por %p129, %p130
      %p133 = scmp.ne.s32.totalorder %s116, %s132
      %p134 = scmp.eq.s32.totalorder %s22, 0
      %p135 = por %p133, %p134
      %s136 = ssub.s32 %s23, %s49
      %s137 = ssub.s32 %s24, %s45
      %s138 = sor.u32 %s136, %s137
      %s139 = ssub.s32 %s25, %s41
      %s140 = sor.u32 %s138, %s139
      %p141 = scmp.eq.s32.totalorder %s140, 0
      %s143 = sadd.s32 %s142, 1
      %s144 = scalar_select %p141, %s142, %s143
      %p147 = pneg %p141
      %p148 = scmp.eq.s32.totalorder %s16, 2
      %p149 = por %p147, %p148
      %p150 = scmp.ne.s32.totalorder %s142, %s145
      %p151 = scmp.eq.s32.totalorder %s16, 0
      %p152 = por %p150, %p151
      %p153 = scmp.ne.s32.totalorder %s142, %s145
      %p154 = scmp.eq.s32.totalorder %s21, 2
      %p155 = por %p153, %p154
      %p156 = scmp.ne.s32.totalorder %s145, %s146
      %p157 = scmp.eq.s32.totalorder %s21, 0
      %p158 = por %p156, %p157
      %p159 = scmp.ne.s32.totalorder %s145, %s146
      %p160 = scmp.eq.s32.totalorder %s22, 2
      %p161 = por %p159, %p160
      %p163 = scmp.ne.s32.totalorder %s146, %s162
      %p164 = scmp.eq.s32.totalorder %s22, 0
      %p165 = por %p163, %p164
      %p166 = scmp.le.s32.totalorder 1, %s16
      %p167 = scmp.lt.s32.totalorder %s16, 4
      %p168 = pnand %p166, %p167
      %p169 = pneg %p168
      // Predicated region
      $region9: #{tpu_custom_call.1} parent=5 // pred_check
        _
      $region10: #{tpu_custom_call.1} parent=5 // pred_check_branch
        %171 = sbr.rel (%p168) target = $region12
      $region11: #{tpu_custom_call.1} parent=5 // pred_region
        %s172 = ssub.s32 %s16, 1
        // Predicated region
        $region13: #{tpu_custom_call.1} parent=11 // pred_check
          %p173 = pneg %p70
        $region14: #{tpu_custom_call.1} parent=11 // pred_check_branch
          %175 = sbr.rel (%p173) target = $region16
        $region15: #{tpu_custom_call.1} parent=11 // pred_region
          %s176 = smul.u32 2, %s28
          %s178 = ssub.s32 128, 128
          %179 = vsyncadd [#allocation4], %s178
          %s180 = sadd.s32 %s30, %s176
          %s181 = smul.addr %s180, 64
          %s182 = scalar_lea.hbm %s0, %s181
          %s183 = sshll.u32 [#allocation3], 4
          %s184 = int_to_ptr.vmem [resolvable:$true] %s183
          %189 = dma.hbm_to_vmem [thread:$0]  %s182, 128, %s184, [#allocation4], 64, 64, 4
        $region16: #{tpu_custom_call.1} parent=11 // pred_fallthru
          _
      $region12: #{tpu_custom_call.1} parent=5 // pred_fallthru
        _
      %p190 = scmp.lt.s32.totalorder %s16, 3
      // Predicated region
      $region17: #{tpu_custom_call.1} parent=5 // pred_check
        %p191 = pneg %p190
      $region18: #{tpu_custom_call.1} parent=5 // pred_check_branch
        %193 = sbr.rel (%p191) target = $region20
      $region19: #{tpu_custom_call.1} parent=5 // pred_region
        // Predicated region
        $region21: #{tpu_custom_call.1} parent=19 // pred_check
          %p194 = pneg %p94
        $region22: #{tpu_custom_call.1} parent=19 // pred_check_branch
          %196 = sbr.rel (%p194) target = $region24
        $region23: #{tpu_custom_call.1} parent=19 // pred_region
          %s197 = sand.u32 %s84, 1
          %s198 = scalar_lea.sflag [#allocation7], %s197
          %s199 = sand.u32 %s84, 1
          %s200 = smul.addr %s199, 16
          %s201 = scalar_lea.vmem [#allocation6], %s200
          %s202 = smul.u32 4, %s26
          %s204 = ssub.s32 256, 256
          %205 = vsyncadd %s198, %s204
          %s206 = sadd.s32 %s25, %s202
          %s207 = smul.addr %s23, 4
          %s208 = sadd.s32 %s206, %s207
          %s209 = smul.addr %s208, 64
          %s210 = scalar_lea.hbm %s1, %s209
          %s211 = sshll.u32 %s201, 4
          %s212 = int_to_ptr.vmem [resolvable:$true] %s211
          %217 = dma.hbm_to_vmem [thread:$0]  %s210, 256, %s212, %s198, 64, 64, 4
        $region24: #{tpu_custom_call.1} parent=19 // pred_fallthru
          _
        // Predicated region
        $region25: #{tpu_custom_call.1} parent=19 // pred_check
          %p218 = pneg %p122
        $region26: #{tpu_custom_call.1} parent=19 // pred_check_branch
          %220 = sbr.rel (%p218) target = $region28
        $region27: #{tpu_custom_call.1} parent=19 // pred_region
          %p221 = scmp.lt.s32.totalorder %s23, 2
          %s222 = scalar_select %p221, %s23, 2
          %p223 = scmp.lt.s32.totalorder %s25, 0
          %s224 = scalar_select %p223, %s25, 0
          %s225 = sadd.s32 %s224, %s222
          %s226 = scalar_lea.vmem %s2, %s225
        $region28: #{tpu_custom_call.1} parent=19 // pred_fallthru
          _
      $region20: #{tpu_custom_call.1} parent=5 // pred_fallthru
        _
      %p227 = scmp.le.s32.totalorder 1, %s16
      %p228 = scmp.lt.s32.totalorder %s16, 4
      %p229 = pnand %p227, %p228
      %p230 = pneg %p229
      // Predicated region
      $region29: #{tpu_custom_call.1} parent=5 // pred_check
        _
      $region30: #{tpu_custom_call.1} parent=5 // pred_check_branch
        %232 = sbr.rel (%p229) target = $region32
      $region31: #{tpu_custom_call.1} parent=5 // pred_region
        %s233 = ssub.s32 %s16, 1
        // Predicated region
        $region33: #{tpu_custom_call.1} parent=31 // pred_check
          %p234 = pneg %p70
        $region34: #{tpu_custom_call.1} parent=31 // pred_check_branch
          %236 = sbr.rel (%p234) target = $region36
        $region35: #{tpu_custom_call.1} parent=31 // pred_region
          %237 = dma.done [#allocation4], 128
        $region36: #{tpu_custom_call.1} parent=31 // pred_fallthru
          _
        %s238 = sand.u32 %s87, 1
        %s239 = scalar_lea.sflag [#allocation7], %s238
        %s240 = sand.u32 %s87, 1
        %s241 = smul.addr %s240, 16
        %s242 = scalar_lea.vmem [#allocation6], %s241
        // Predicated region
        $region37: #{tpu_custom_call.1} parent=31 // pred_check
          %p243 = pneg %p100
        $region38: #{tpu_custom_call.1} parent=31 // pred_check_branch
          %245 = sbr.rel (%p243) target = $region40
        $region39: #{tpu_custom_call.1} parent=31 // pred_region
          %246 = dma.done %s239, 256
        $region40: #{tpu_custom_call.1} parent=31 // pred_fallthru
          _
        %p247 = pneg %p70
        %p248 = pneg %p67
        %s249 = sand.u32 %s87, 1
        %s250 = scalar_lea.sflag [#allocation7], %s249
        %s251 = sand.u32 %s87, 1
        %s252 = smul.addr %s251, 16
        %s253 = scalar_lea.vmem [#allocation6], %s252
        %p254 = pneg %p100
        %p255 = pneg %p97
        %p256 = scmp.lt.s32.totalorder %s27, 2
        %s257 = scalar_select %p256, %s27, 2
        %p258 = scmp.lt.s32.totalorder %s29, 0
        %s259 = scalar_select %p258, %s29, 0
        %s260 = sadd.s32 %s259, %s257
        %s261 = scalar_lea.vmem %s2, %s260
        %p262 = pneg %p128
        %p263 = pneg %p125
        %p264 = pneg %p158
        %p265 = pneg %p155
        %s266 = sand.u32 %s145, 1
        %s267 = scalar_lea.sflag [#allocation5], %s266
        %s268 = sand.u32 %s145, 1
        %s269 = smul.addr %s268, 8
        %s270 = scalar_lea.vmem [#allocation8], %s269
        %s271 = smul.u32 2, %s28
        %s272 = smul.u32 4, %s30
        %p273 = scmp.lt.s32.totalorder %s27, 2
        %s274 = scalar_select %p273, %s27, 2
        %p275 = scmp.lt.s32.totalorder %s29, 0
        %s276 = scalar_select %p275, %s29, 0
        %s277 = sadd.s32 %s276, %s274
        %s278 = scalar_lea.vmem %s2, %s277
        %s279 = smul.u32 2, %s28
        %p281 = scmp.eq.s32.totalorder %s30, 0
        // Predicated region
        $region41: #{tpu_custom_call.1} parent=31 // pred_check
          %p282 = pneg %p281
        $region42: #{tpu_custom_call.1} parent=31 // pred_check_branch
          %284 = sbr.rel (%p282) target = $region44
        $region43: #{tpu_custom_call.1} parent=31 // pred_region
          %vm285 = vcmask 261120
          %286 = vst.msk [vmem:[#allocation2] sm:$0xff] %vm285, 0.0
          %287 = vst.msk [vmem:[#allocation2 + $0x8] sm:$0xff] %vm285, 0.0
        $region44: #{tpu_custom_call.1} parent=31 // pred_fallthru
          _
        %v288 = vld [vmem:[#allocation2] sm:$0xff]
        %v289 = vld [vmem:[#allocation2 + $0x8] sm:$0xff]
        %v290 = vld [vmem:[#allocation3] sm:$0xf]
        %v291 = vld [vmem:[#allocation3 + $0x4] sm:$0xf]
        %v292 = vld [vmem:[%s242] sm:$0xf]
        %v293 = vld [vmem:[%s242 + $0x4] sm:$0xf]
        %v294 = vld [vmem:[%s242 + $0x8] sm:$0xf]
        %v295 = vld [vmem:[%s242 + $0xc] sm:$0xf]
        %v298 = vunpack.c.l.b16 %v290
        %v299 = vunpack.c.l.b16 %v291
        %v300 = vpack.c.b16 %v299, %v298
        %v305 = vunpack.c.l.b16 %v292
        %v306 = vunpack.c.l.b16 %v293
        %v307 = vunpack.c.l.b16 %v294
        %v308 = vunpack.c.l.b16 %v295
        %v309 = vpack.c.b16 %v306, %v305
        %v310 = vpack.c.b16 %v308, %v307
        %vm313 = vcmask 261120
        %v315 = vsel %vm313, %v300, 0
        %317 = vmatprep.subr.bf16.mxu0 0
        %318 = vmatpush1.bf16.msra.mxu0 %v309
        %319 = vmatprep.subr.bf16.mxu0 0
        %320 = vmatpush1.bf16.msra.mxu0 %v310
        %321 = vmatprep.subr.bf16.mxu0 0
        %322 = vmatpush1.bf16.msra.mxu0 0
        %323 = vmatprep.subr.bf16.mxu0 0
        %324 = vmatpush1.bf16.msra.mxu0 0
        %325 = vmatprep.subr.bf16.mxu0 0
        %326 = vmatpush1.bf16.msra.mxu0 0
        %327 = vmatprep.subr.bf16.mxu0 0
        %328 = vmatpush1.bf16.msra.mxu0 0
        %329 = vmatprep.subr.bf16.mxu0 0
        %330 = vmatpush1.bf16.msra.mxu0 0
        %331 = vmatprep.subr.bf16.mxu0 0
        %332 = vmatpush1.bf16.msra.mxu0 0
        %333 = vmatprep.subr.bf16.mxu0 0
        %334 = vmatpush1.bf16.msra.mxu0 0
        %335 = vmatprep.subr.bf16.mxu0 0
        %336 = vmatpush1.bf16.msra.mxu0 0
        %337 = vmatprep.subr.bf16.mxu0 0
        %338 = vmatpush1.bf16.msra.mxu0 0
        %339 = vmatprep.subr.bf16.mxu0 0
        %340 = vmatpush1.bf16.msra.mxu0 0
        %341 = vmatprep.subr.bf16.mxu0 0
        %342 = vmatpush1.bf16.msra.mxu0 0
        %343 = vmatprep.subr.bf16.mxu0 0
        %344 = vmatpush1.bf16.msra.mxu0 0
        %345 = vmatprep.subr.bf16.mxu0 0
        %346 = vmatpush1.bf16.msra.mxu0 0
        %347 = vmatprep.subr.bf16.mxu0 0
        %348 = vmatpush1.bf16.msra.mxu0 0
        %349 = vmatprep.mubr.bf16.mxu0 0
        %350 = vmatmul.mubr.bf16.gmra.mrb[0].mxu0 %v315
        %v351 = vpop.f32.mrb[0].mxu0
        %v352 = vadd.f32 0.0, %v351
        %v353 = vpop.f32.mrb[0].mxu0
        %v354 = vpop.f32.mrb[0].mxu0
        %v355 = vadd.f32 0.0, %v354
        %v356 = vpop.f32.mrb[0].mxu0
        %357 = vdwg.mxu0
        %v358 = vadd.f32 %v288, %v352
        %v359 = vadd.f32 %v289, %v355
        %360 = vst.msk [vmem:[#allocation2] sm:$0xff] %vm313, %v358
        %361 = vst.msk [vmem:[#allocation2 + $0x8] sm:$0xff] %vm313, %v359
        // Predicated region
        $region45: #{tpu_custom_call.1} parent=31 // pred_check
          %p362 = pneg %p281
        $region46: #{tpu_custom_call.1} parent=31 // pred_check_branch
          %364 = sbr.rel (%p362) target = $region48
        $region47: #{tpu_custom_call.1} parent=31 // pred_region
          %v365 = vld [vmem:[#allocation2] sm:$0xff]
          %v366 = vld [vmem:[#allocation2 + $0x8] sm:$0xff]
          %v367 = vld [vmem:[%s278] sm:$0x1]
          %v369 = vlaneseq
          %v370 = vshrl.u32 %v369, 7
          %v371 = vsub.s32 0, %v370
          %v372 = vrot.slane %v367, %v371
          %v374 = vadd.f32 %v365, %v372
          %v375 = vadd.f32 %v366, %v372
          %v376 = vpack.c.bf16 %v375, %v374
          %v378 = vunpack.c.l.b16 %v376
          %v379 = vunpack.c.h.b16 %v376
          %v380 = vpack.c.b16 %v378, %v378
          %v381 = vpack.c.b16 %v379, %v379
          %vm384 = vcmask 257024
          %385 = vst.msk [vmem:[%s270] sm:$0xf] %vm384, %v380
          %386 = vst.msk [vmem:[%s270 + $0x4] sm:$0xf] %vm384, %v381
        $region48: #{tpu_custom_call.1} parent=31 // pred_fallthru
          _
        %s387 = sand.u32 %s145, 1
        %s388 = scalar_lea.sflag [#allocation5], %s387
        %s389 = sand.u32 %s145, 1
        %s390 = smul.addr %s389, 8
        %s391 = scalar_lea.vmem [#allocation8], %s390
        // Predicated region
        $region49: #{tpu_custom_call.1} parent=31 // pred_check
          %p392 = pneg %p155
        $region50: #{tpu_custom_call.1} parent=31 // pred_check_branch
          %394 = sbr.rel (%p392) target = $region52
        $region51: #{tpu_custom_call.1} parent=31 // pred_region
          %s395 = smul.u32 2, %s28
          %s397 = ssub.s32 128, 128
          %398 = vsyncadd %s388, %s397
          %s399 = sadd.s32 %s29, %s395
          %s400 = smul.addr %s27, 2
          %s401 = sadd.s32 %s399, %s400
          %s402 = smul.addr %s401, 64
          %s403 = scalar_lea.hbm %s3, %s402
          %s404 = sshll.u32 %s391, 4
          %s405 = int_to_ptr.vmem [resolvable:$true] %s404
          %410 = dma.vmem_to_hbm [thread:$0]  %s405, 128, %s403, %s388, 64, 64, 4
        $region52: #{tpu_custom_call.1} parent=31 // pred_fallthru
          _
      $region32: #{tpu_custom_call.1} parent=5 // pred_fallthru
        _
      %p411 = scmp.le.s32.totalorder 2, %s16
      // Predicated region
      $region53: #{tpu_custom_call.1} parent=5 // pred_check
        %p412 = pneg %p411
      $region54: #{tpu_custom_call.1} parent=5 // pred_check_branch
        %414 = sbr.rel (%p412) target = $region56
      $region55: #{tpu_custom_call.1} parent=5 // pred_region
        %s415 = ssub.s32 %s16, 2
        // Predicated region
        $region57: #{tpu_custom_call.1} parent=55 // pred_check
          %p416 = pneg %p161
        $region58: #{tpu_custom_call.1} parent=55 // pred_check_branch
          %418 = sbr.rel (%p416) target = $region60
        $region59: #{tpu_custom_call.1} parent=55 // pred_region
          %s419 = sand.u32 %s146, 1
          %s420 = scalar_lea.sflag [#allocation5], %s419
          %s421 = sand.u32 %s146, 1
          %s422 = smul.addr %s421, 8
          %s423 = scalar_lea.vmem [#allocation8], %s422
          %424 = dma.done %s420, 128
        $region60: #{tpu_custom_call.1} parent=55 // pred_fallthru
          _
      $region56: #{tpu_custom_call.1} parent=5 // pred_fallthru
        _
    $region6: #{tpu_custom_call.1} parent=1 // loop_footer
      %s20 = sadd.s32 1, %s16
    $region7: #{tpu_custom_call.1} parent=1 // loop_footer_branch
      %15 = sbr.rel target = $region3
    $region8: #{tpu_custom_call.1} parent=1 // loop_exit
      _
    %425 = vsyncpa [#allocation4], 1
    %s426 = scalar_lea.sflag [#allocation4], 1
    %427 = vsyncpa %s426, 1
    %428 = vsyncpa [#allocation7], 1
    %s429 = scalar_lea.sflag [#allocation7], 1
    %430 = vsyncpa %s429, 1
    %431 = vsyncpa [#allocation5], 1
    %s432 = scalar_lea.sflag [#allocation5], 1
    %433 = vsyncpa %s432, 1

</llo_original>
